<compile_context>
chip_gen: v7x
topology: tpu7x:2x2x1
jax: 0.10.0
libtpu: 0.0.40
codegen_flags: <defaults>
</compile_context>

<pallas_src>
import functools

import jax
import jax.numpy as jnp
from jax import lax
from jax.experimental import pallas as pl
from jax.experimental.pallas import tpu as pltpu


def _round_up(n, m):
    return ((n + m - 1) // m) * m


def _num_tensorcores():
    """Best-effort TensorCore count per chip (v7x has 2; v5e/v6e have 1)."""
    try:
        kind = jax.devices()[0].device_kind.lower()
        if "v7" in kind or "tpu7" in kind:
            return 2
    except Exception:
        pass
    return 1


# --------------------------------------------------------------------------------------
# Kernel
# --------------------------------------------------------------------------------------
def mlp_kernel(x_ref, w1_ref, b1_ref, w2_ref, b2_ref, o_ref):
    # x_ref : [TM, IN]    f32  (streamed batch tile)
    # w1_ref: [IN, HPAD]  f32  (VMEM-resident across the grid)
    # b1_ref: [1, HPAD]   f32  (VMEM-resident)
    # w2_ref: [1, HPAD]   f32  (second Linear's weight as a row, VMEM-resident)
    # b2_ref: [1, 1]      f32  (SMEM scalar)
    # o_ref : [1, TM]     f32  (batch along lanes -> unmasked lane-dense store)

    # Layer 1 on the MXU (f32 accumulate); bias + ReLU on the VPU.
    h = jnp.dot(x_ref[...], w1_ref[...], preferred_element_type=jnp.float32)   # [TM, HPAD]
    h = jnp.maximum(h + b1_ref[...], 0.0)

    # Layer 2: contract h's hidden (lane) axis against the single w2 row.  The NT
    # dot_general lands the result as [1, TM] with batch on the lane axis, so the
    # store below is a plain unmasked, lane-dense vst.
    y = lax.dot_general(
        w2_ref[...], h,
        dimension_numbers=(((1,), (1,)), ((), ())),
        preferred_element_type=jnp.float32,
    )                                                                           # [1, TM]
    o_ref[...] = (y + b2_ref[0, 0]).astype(o_ref.dtype)


# --------------------------------------------------------------------------------------
# One-time parameter preparation (hoisted out of the per-call path)
# --------------------------------------------------------------------------------------
def prepare_params(w1, b1, w2, b2, *, hidden_pad=128):
    """Pad hidden dim to 128 (zeros -> numerically exact), reshape w2/b2. Do once."""
    hidden = w1.shape[1]
    assert hidden <= hidden_pad
    pad_h = hidden_pad - hidden
    w1_p = jnp.pad(w1.astype(jnp.float32), ((0, 0), (0, pad_h)))            # [IN, HPAD]
    b1_p = jnp.pad(b1.astype(jnp.float32), ((0, 0), (0, pad_h)))            # [1, HPAD]
    w2_row = jnp.pad(w2.reshape(1, hidden).astype(jnp.float32),
                     ((0, 0), (0, pad_h)))                                   # [1, HPAD]
    b2_s = b2.reshape(1, 1).astype(jnp.float32)                              # [1, 1]
    return w1_p, b1_p, w2_row, b2_s


# --------------------------------------------------------------------------------------
# Forward (jitted: pad/slice/reshape + pallas_call dispatch as one executable)
# --------------------------------------------------------------------------------------
@functools.partial(jax.jit, static_argnames=("tm_max",))
def simple_model_forward(x, w1_p, b1_p, w2_row, b2_s, *, tm_max=4096):
    """Forward of Linear(IN->H) -> ReLU -> Linear(H->1).

    x: [B, IN] f32.  w1_p/b1_p/w2_row/b2_s come from prepare_params().
    Returns [B, 1] f32.
    """
    batch, in_dim = x.shape
    hidden_pad = w1_p.shape[1]
    assert w1_p.shape[0] == in_dim

    # ---- tiling: minimize grid steps (launch-overhead bound workload) ----------------
    n_cores = _num_tensorcores()            # trace-time Python; 2 on v7x, else 1
    tm_max = _round_up(tm_max, 128)
    per_core = pl.cdiv(batch, n_cores)
    if n_cores == 1 and per_core <= tm_max:
        # Single grid step covering the whole (8-aligned) batch.
        tm = _round_up(batch, 8)
    else:
        # Multi-tile grid: lane-dense output blocks need a 128-multiple tile.
        tm = min(tm_max, _round_up(per_core, 128))
    b_pad = _round_up(batch, tm)
    n_tiles = b_pad // tm

    x_in = x.astype(jnp.float32)
    if b_pad != batch:
        # Tiny tail pad (< tm rows); fuses inside the jit.  Padded rows are sliced off
        # below (their outputs are w2·ReLU(b1)+b2, never consumed).
        x_in = jnp.pad(x_in, ((0, b_pad - batch), (0, 0)))

    bytes_accessed = (
        x_in.size * 4
        + w1_p.size * 4 + b1_p.size * 4 + w2_row.size * 4 + 4
        + b_pad * 4
    )

    out = pl.pallas_call(
        mlp_kernel,
        out_shape=jax.ShapeDtypeStruct((1, b_pad), jnp.float32),
        grid=(n_tiles,),
        in_specs=[
            pl.BlockSpec((tm, in_dim), lambda i: (i, 0)),             # x: streamed tile
            pl.BlockSpec((in_dim, hidden_pad), lambda i: (0, 0)),     # w1: resident
            pl.BlockSpec((1, hidden_pad), lambda i: (0, 0)),          # b1: resident
            pl.BlockSpec((1, hidden_pad), lambda i: (0, 0)),          # w2 row: resident
            pl.BlockSpec(memory_space=pltpu.MemorySpace.SMEM),        # b2: SMEM scalar
        ],
        # Lane-dense output: batch lies along the lane axis of a single [1, B_pad] row.
        out_specs=pl.BlockSpec((1, tm), lambda i: (0, i)),
        compiler_params=pltpu.CompilerParams(
            dimension_semantics=("parallel",),   # independent batch tiles (v7x: 2 TCs)
        ),
        cost_estimate=pl.CostEstimate(
            flops=2 * b_pad * hidden_pad * (in_dim + 1),
            transcendentals=0,
            bytes_accessed=int(bytes_accessed),
        ),
    )(x_in, w1_p, b1_p, w2_row, b2_s)

    # Undo lane-dense layout + batch padding (layout plumbing only, fused in the jit).
    return out[0, :batch].reshape(batch, 1)


def init_params(key, input_size=20, hidden_size=100):
    # Mimics PyTorch's uniform(-1/sqrt(fan_in), 1/sqrt(fan_in)) init, JAX weight layout.
    k1, k2, k3, k4 = jax.random.split(key, 4)
    bound1 = 1.0 / jnp.sqrt(input_size)
    bound2 = 1.0 / jnp.sqrt(hidden_size)
    w1 = jax.random.uniform(k1, (input_size, hidden_size), jnp.float32, -bound1, bound1)
    b1 = jax.random.uniform(k2, (1, hidden_size), jnp.float32, -bound1, bound1)
    w2 = jax.random.uniform(k3, (hidden_size, 1), jnp.float32, -bound2, bound2)
    b2 = jax.random.uniform(k4, (1, 1), jnp.float32, -bound2, bound2)
    return w1, b1, w2, b2


if __name__ == "__main__":
    key = jax.random.PRNGKey(0)
    k_x, k_p = jax.random.split(key)

    # Small deterministic shapes consistent with the module: Linear(20 -> 100 -> 1).
    batch, input_size, hidden_size = 64, 20, 100
    x = jax.random.normal(k_x, (batch, input_size), jnp.float32)
    w1, b1, w2, b2 = init_params(k_p, input_size, hidden_size)

    # One-time weight prep (hoisted out of the per-call path).
    params = prepare_params(w1, b1, w2, b2)

    out = simple_model_forward(x, *params)
    out = jax.block_until_ready(out)

    # Pure-JAX f32 reference; everything is f32 now so parity is tight.
    ref = jnp.maximum(x @ w1 + b1, 0.0) @ w2 + b2
    assert out.shape == (batch, 1)
    assert jnp.allclose(out, ref, atol=1e-5, rtol=1e-5), float(jnp.max(jnp.abs(out - ref)))

    print("KERNEL_OK")
</pallas_src>

<mosaic_0001>
module attributes {stable_mosaic.version = 11 : i64} {
  func.func @mlp_kernel(%arg0: i32, %arg1: memref<64x20xf32, #tpu.memory_space<vmem>>, %arg2: memref<20x128xf32, #tpu.memory_space<vmem>>, %arg3: memref<1x128xf32, #tpu.memory_space<vmem>>, %arg4: memref<1x128xf32, #tpu.memory_space<vmem>>, %arg5: memref<1x1xf32, #tpu.memory_space<smem>>, %arg6: memref<1x64xf32, #tpu.memory_space<vmem>>) attributes {dimension_semantics = [#tpu.dimension_semantics<parallel>], iteration_bounds = array<i64: 1>, scalar_prefetch = 0 : i64, scratch_operands = 0 : i64, tpu.core_type = #tpu.core_type<tc>, window_params = [{transform_indices = @transform_0, window_bounds = array<i64: 64, 20>}, {pipeline_mode = #tpu.pipeline_mode<synchronous>, transform_indices = @transform_1, window_bounds = array<i64: 20, 128>}, {pipeline_mode = #tpu.pipeline_mode<synchronous>, transform_indices = @transform_2, window_bounds = array<i64: 1, 128>}, {pipeline_mode = #tpu.pipeline_mode<synchronous>, transform_indices = @transform_3, window_bounds = array<i64: 1, 128>}, {transform_indices = @transform_4, window_bounds = array<i64: 1, 1>}, {transform_indices = @transform_5, window_bounds = array<i64: 1, 64>}]} {
    %c0 = arith.constant 0 : index
    %c0_0 = arith.constant 0 : index
    %0 = vector.load %arg1[%c0, %c0_0] : memref<64x20xf32, #tpu.memory_space<vmem>>, vector<64x20xf32>
    %c0_1 = arith.constant 0 : index
    %c0_2 = arith.constant 0 : index
    %1 = vector.load %arg2[%c0_1, %c0_2] : memref<20x128xf32, #tpu.memory_space<vmem>>, vector<20x128xf32>
    %cst = arith.constant dense<0.000000e+00> : vector<64x128xf32>
    %2 = tpu.matmul %0, %1, %cst {dimension_numbers = #tpu.dot_dimension_numbers<[1], [0], [0], [1], [0, 0, 1, 1], [], []>} : vector<64x20xf32>, vector<20x128xf32>, vector<64x128xf32> -> vector<64x128xf32>
    %c0_3 = arith.constant 0 : index
    %c0_4 = arith.constant 0 : index
    %3 = vector.load %arg3[%c0_3, %c0_4] : memref<1x128xf32, #tpu.memory_space<vmem>>, vector<1x128xf32>
    %4 = vector.broadcast %3 : vector<1x128xf32> to vector<64x128xf32>
    %5 = arith.addf %2, %4 : vector<64x128xf32>
    %cst_5 = arith.constant 0.000000e+00 : f32
    %6 = vector.broadcast %cst_5 : f32 to vector<64x128xf32>
    %7 = arith.maximumf %5, %6 : vector<64x128xf32>
    %c0_6 = arith.constant 0 : index
    %c0_7 = arith.constant 0 : index
    %8 = vector.load %arg4[%c0_6, %c0_7] : memref<1x128xf32, #tpu.memory_space<vmem>>, vector<1x128xf32>
    %cst_8 = arith.constant dense<0.000000e+00> : vector<1x64xf32>
    %9 = tpu.matmul %8, %7, %cst_8 {dimension_numbers = #tpu.dot_dimension_numbers<[1], [1], [0], [0], [0, 0, 1, 0], [], []>} : vector<1x128xf32>, vector<64x128xf32>, vector<1x64xf32> -> vector<1x64xf32>
    %c0_9 = arith.constant 0 : index
    %c0_10 = arith.constant 0 : index
    %10 = memref.load %arg5[%c0_9, %c0_10] : memref<1x1xf32, #tpu.memory_space<smem>>
    %11 = vector.broadcast %10 : f32 to vector<1x64xf32>
    %12 = arith.addf %9, %11 : vector<1x64xf32>
    %c0_11 = arith.constant 0 : index
    %c0_12 = arith.constant 0 : index
    %13 = vector.load %arg6[%c0_11, %c0_12] : memref<1x64xf32, #tpu.memory_space<vmem>>, vector<1x64xf32>
    tpu.vector_store %arg6[%c0_11, %c0_12], %12 {strides = array<i32>} : memref<1x64xf32, #tpu.memory_space<vmem>>, vector<1x64xf32>,
    return
  }
  func.func @transform_0(%arg0: i32) -> (i32, i32) {
    %c0_i32 = arith.constant 0 : i32
    %c0_i32_0 = arith.constant 0 : i32
    return %arg0, %c0_i32 : i32, i32
  }
  func.func @transform_1(%arg0: i32) -> (i32, i32) {
    %c0_i32 = arith.constant 0 : i32
    %c0_i32_0 = arith.constant 0 : i32
    %c0_i32_1 = arith.constant 0 : i32
    return %c0_i32, %c0_i32_0 : i32, i32
  }
  func.func @transform_2(%arg0: i32) -> (i32, i32) {
    %c0_i32 = arith.constant 0 : i32
    %c0_i32_0 = arith.constant 0 : i32
    %c0_i32_1 = arith.constant 0 : i32
    return %c0_i32, %c0_i32_0 : i32, i32
  }
  func.func @transform_3(%arg0: i32) -> (i32, i32) {
    %c0_i32 = arith.constant 0 : i32
    %c0_i32_0 = arith.constant 0 : i32
    %c0_i32_1 = arith.constant 0 : i32
    return %c0_i32, %c0_i32_0 : i32, i32
  }
  func.func @transform_4(%arg0: i32) -> (i32, i32) {
    %c0_i32 = arith.constant 0 : i32
    %c0_i32_0 = arith.constant 0 : i32
    %c0_i32_1 = arith.constant 0 : i32
    return %c0_i32, %c0_i32_0 : i32, i32
  }
  func.func @transform_5(%arg0: i32) -> (i32, i32) {
    %c0_i32 = arith.constant 0 : i32
    %c0_i32_0 = arith.constant 0 : i32
    return %c0_i32, %arg0 : i32, i32
  }
}

</mosaic_0001>

<llo_original>
// kernel: simple_model_forward.1
$region0: #{simple_model_forward.1}
  #allocation0 [shape = 'u32[]', space=smem, size = 0x4, offset = 0x4, fixed_abs, tag = 'smem constant byte address 0x4 - core index']
  #allocation1 [shape = 'u32[144,128]{1,0:T(1,128)}', space=vmem, size = 0x12000, scoped, tag = 'internal scratch']
  #allocation2 [shape = 'f32[1,1]{1,0:T(1,128)S(6)}', space=smem, size = 0x200, scoped, tag = 'scoped memory for simple_model_forward.1']
  %s0 = inlined_call_operand.vmem [shape: f32[64,20], index: 0, kind: input, shape index: {}]
  %s1 = inlined_call_operand.vmem [shape: f32[20,128], index: 1, kind: input, shape index: {}]
  %s2 = inlined_call_operand.vmem [shape: f32[1,128], index: 2, kind: input, shape index: {}]
  %s3 = inlined_call_operand.vmem [shape: f32[1,128], index: 3, kind: input, shape index: {}]
  %s4 = inlined_call_operand.<no memory space> [shape: f32[1,1], index: 4, kind: input, shape index: {}]
  %s5 = inlined_call_operand.hbm [shape: f32[1,64], index: 5, kind: output, shape index: {}]
  %s6 = sld [smem:[#allocation0]]
  $region30: #{simple_model_forward.1} parent=0
    _
  %s8 = ssub.s32 1, %s6
  %s9 = scalar_select 0, %s8, %s6
  %10 = sst [smem:[#allocation2]] %s4
  $region1: #{simple_model_forward.1} parent=0
    #allocation3 [shape = 'u8[512]{0}', space=vmem, size = 0x400, scoped, tag = 'output window, operand 0, single buffered']
    #allocation4 [shape = 's32[1]{0}', space=sflag, size = 0x4, scoped, tag = 'scoped memory for simple_model_forward.1']
    %11 = vsyncpa [#allocation4], 0
    // Predicated region
    $region2: #{simple_model_forward.1} parent=1 // pred_check
      _
    $region3: #{simple_model_forward.1} parent=1 // pred_check_branch
      %13 = sbr.rel (0) target = $region5
    $region4: #{simple_model_forward.1} parent=1 // pred_region
      _
    $region5: #{simple_model_forward.1} parent=1 // pred_fallthru
      _
    // Predicated region
    $region6: #{simple_model_forward.1} parent=1 // pred_check
      _
    $region7: #{simple_model_forward.1} parent=1 // pred_check_branch
      %15 = sbr.rel (0) target = $region9
    $region8: #{simple_model_forward.1} parent=1 // pred_region
      _
    $region9: #{simple_model_forward.1} parent=1 // pred_fallthru
      _
    // Predicated region
    $region10: #{simple_model_forward.1} parent=1 // pred_check
      _
    $region11: #{simple_model_forward.1} parent=1 // pred_check_branch
      %17 = sbr.rel (0) target = $region13
    $region12: #{simple_model_forward.1} parent=1 // pred_region
      _
    $region13: #{simple_model_forward.1} parent=1 // pred_fallthru
      _
    // Predicated region
    $region14: #{simple_model_forward.1} parent=1 // pred_check
      _
    $region15: #{simple_model_forward.1} parent=1 // pred_check_branch
      %19 = sbr.rel (0) target = $region17
    $region16: #{simple_model_forward.1} parent=1 // pred_region
      _
    $region17: #{simple_model_forward.1} parent=1 // pred_fallthru
      _
    // Predicated region
    $region18: #{simple_model_forward.1} parent=1 // pred_check
      _
    $region19: #{simple_model_forward.1} parent=1 // pred_check_branch
      %21 = sbr.rel (0) target = $region21
    $region20: #{simple_model_forward.1} parent=1 // pred_region
      _
    $region21: #{simple_model_forward.1} parent=1 // pred_fallthru
      _
    %v22 = vld [vmem:[%s0] sm:$0xff]
    %v23 = vld [vmem:[%s0 + $0x8] sm:$0xff]
    %v24 = vld [vmem:[%s0 + $0x10] sm:$0xff]
    %v25 = vld [vmem:[%s0 + $0x18] sm:$0xff]
    %v26 = vld [vmem:[%s0 + $0x20] sm:$0xff]
    %v27 = vld [vmem:[%s0 + $0x28] sm:$0xff]
    %v28 = vld [vmem:[%s0 + $0x30] sm:$0xff]
    %v29 = vld [vmem:[%s0 + $0x38] sm:$0xff]
    %v30 = vld [vmem:[%s1] sm:$0xff]
    %v31 = vld [vmem:[%s1 + $0x8] sm:$0xff]
    %v32 = vld [vmem:[%s1 + $0x10] sm:$0xf]
    %v33 = vld [vmem:[%s2] sm:$0x1]
    %v35 = vlaneseq
    %v36 = vshrl.u32 %v35, 7
    %v37 = vsub.s32 0, %v36
    %v38 = vrot.slane %v33, %v37
    %vm40 = vcmask 162816
    %v42 = vsel %vm40, %v22, 0
    %v45 = vsel %vm40, %v23, 0
    %v48 = vsel %vm40, %v24, 0
    %v51 = vsel %vm40, %v25, 0
    %v54 = vsel %vm40, %v26, 0
    %v57 = vsel %vm40, %v27, 0
    %v60 = vsel %vm40, %v28, 0
    %v63 = vsel %vm40, %v29, 0
    %vm65 = vcmask 1043456
    %v67 = vsel %vm65, %v32, 0
    %69 = vmatprep.subr.mxu0 0.0
    %70 = vmatpush1.msra.mxu0 %v30
    %71 = vmatprep.subr.mxu0 0.0
    %72 = vmatpush1.msra.mxu0 %v31
    %73 = vmatprep.subr.mxu0 0.0
    %74 = vmatpush1.msra.mxu0 %v67
    %75 = vmatprep.subr.mxu0 0.0
    %76 = vmatpush1.msra.mxu0 0.0
    %77 = vmatprep.subr.mxu0 0.0
    %78 = vmatpush1.msra.mxu0 0.0
    %79 = vmatprep.subr.mxu0 0.0
    %80 = vmatpush1.msra.mxu0 0.0
    %81 = vmatprep.subr.mxu0 0.0
    %82 = vmatpush1.msra.mxu0 0.0
    %83 = vmatprep.subr.mxu0 0.0
    %84 = vmatpush1.msra.mxu0 0.0
    %85 = vmatprep.subr.mxu0 0.0
    %86 = vmatpush1.msra.mxu0 0.0
    %87 = vmatprep.subr.mxu0 0.0
    %88 = vmatpush1.msra.mxu0 0.0
    %89 = vmatprep.subr.mxu0 0.0
    %90 = vmatpush1.msra.mxu0 0.0
    %91 = vmatprep.subr.mxu0 0.0
    %92 = vmatpush1.msra.mxu0 0.0
    %93 = vmatprep.subr.mxu0 0.0
    %94 = vmatpush1.msra.mxu0 0.0
    %95 = vmatprep.subr.mxu0 0.0
    %96 = vmatpush1.msra.mxu0 0.0
    %97 = vmatprep.subr.mxu0 0.0
    %98 = vmatpush1.msra.mxu0 0.0
    %99 = vmatprep.subr.mxu0 0.0
    %100 = vmatpush1.msra.mxu0 0.0
    %101 = vmatprep.subr.mxu0 0.0
    %102 = vmatpush1.msra.mxu0 0.0
    %103 = vmatprep.subr.mxu0 0.0
    %104 = vmatpush1.msra.mxu0 0.0
    %105 = vmatprep.subr.mxu0 0.0
    %106 = vmatpush1.msra.mxu0 0.0
    %107 = vmatprep.subr.mxu0 0.0
    %108 = vmatpush1.msra.mxu0 0.0
    %109 = vmatprep.subr.mxu0 0.0
    %110 = vmatpush1.msra.mxu0 0.0
    %111 = vmatprep.subr.mxu0 0.0
    %112 = vmatpush1.msra.mxu0 0.0
    %113 = vmatprep.subr.mxu0 0.0
    %114 = vmatpush1.msra.mxu0 0.0
    %115 = vmatprep.subr.mxu0 0.0
    %116 = vmatpush1.msra.mxu0 0.0
    %117 = vmatprep.subr.mxu0 0.0
    %118 = vmatpush1.msra.mxu0 0.0
    %119 = vmatprep.subr.mxu0 0.0
    %120 = vmatpush1.msra.mxu0 0.0
    %121 = vmatprep.subr.mxu0 0.0
    %122 = vmatpush1.msra.mxu0 0.0
    %123 = vmatprep.subr.mxu0 0.0
    %124 = vmatpush1.msra.mxu0 0.0
    %125 = vmatprep.subr.mxu0 0.0
    %126 = vmatpush1.msra.mxu0 0.0
    %127 = vmatprep.subr.mxu0 0.0
    %128 = vmatpush1.msra.mxu0 0.0
    %129 = vmatprep.subr.mxu0 0.0
    %130 = vmatpush1.msra.mxu0 0.0
    %131 = vmatprep.subr.mxu0 0.0
    %132 = vmatpush1.msra.mxu0 0.0
    %133 = vmatprep.mubr.f32.mxu0 0.0
    %134 = vmatmul.mubr.f32.gmra.mrb[0].mxu0 %v42
    %v135 = vpop.f32.mrb[0].mxu0
    %v136 = vadd.f32 %v38, %v135
    %v137 = vpop.f32.mrb[0].mxu0
    %138 = vmatprep.mubr.f32.mxu0 0.0
    %139 = vmatmul.mubr.f32.gmra.mrb[0].mxu0 %v45
    %v140 = vpop.f32.mrb[0].mxu0
    %v141 = vadd.f32 %v38, %v140
    %v142 = vpop.f32.mrb[0].mxu0
    %143 = vmatprep.mubr.f32.mxu0 0.0
    %144 = vmatmul.mubr.f32.gmra.mrb[0].mxu0 %v48
    %v145 = vpop.f32.mrb[0].mxu0
    %v146 = vadd.f32 %v38, %v145
    %v147 = vpop.f32.mrb[0].mxu0
    %148 = vmatprep.mubr.f32.mxu0 0.0
    %149 = vmatmul.mubr.f32.gmra.mrb[0].mxu0 %v51
    %v150 = vpop.f32.mrb[0].mxu0
    %v151 = vadd.f32 %v38, %v150
    %v152 = vpop.f32.mrb[0].mxu0
    %153 = vmatprep.mubr.f32.mxu0 0.0
    %154 = vmatmul.mubr.f32.gmra.mrb[0].mxu0 %v54
    %v155 = vpop.f32.mrb[0].mxu0
    %v156 = vadd.f32 %v38, %v155
    %v157 = vpop.f32.mrb[0].mxu0
    %158 = vmatprep.mubr.f32.mxu0 0.0
    %159 = vmatmul.mubr.f32.gmra.mrb[0].mxu0 %v57
    %v160 = vpop.f32.mrb[0].mxu0
    %v161 = vadd.f32 %v38, %v160
    %v162 = vpop.f32.mrb[0].mxu0
    %163 = vmatprep.mubr.f32.mxu0 0.0
    %164 = vmatmul.mubr.f32.gmra.mrb[0].mxu0 %v60
    %v165 = vpop.f32.mrb[0].mxu0
    %v166 = vadd.f32 %v38, %v165
    %v167 = vpop.f32.mrb[0].mxu0
    %168 = vmatprep.mubr.f32.mxu0 0.0
    %169 = vmatmul.mubr.f32.gmra.mrb[0].mxu0 %v63
    %v170 = vpop.f32.mrb[0].mxu0
    %v171 = vadd.f32 %v38, %v170
    %v172 = vpop.f32.mrb[0].mxu0
    %173 = vdwg.mxu0
    %v174 = vmax.f32 %v136, 0.0
    %v175 = vmax.f32 %v141, 0.0
    %v176 = vmax.f32 %v146, 0.0
    %v177 = vmax.f32 %v151, 0.0
    %v178 = vmax.f32 %v156, 0.0
    %v179 = vmax.f32 %v161, 0.0
    %v180 = vmax.f32 %v166, 0.0
    %v181 = vmax.f32 %v171, 0.0
    %v182 = vld [vmem:[%s3] sm:$0x1]
    %s183 = sld [smem:[#allocation2]]
    %v184 = vstv %s183
    %185 = vmatprep.subr.mxu0 0.0
    %186 = vmatpush1.xpose.msra.mxu0 %v174
    %187 = vmatprep.subr.mxu0 0.0
    %188 = vmatpush1.xpose.msra.mxu0 %v175
    %189 = vmatprep.subr.mxu0 0.0
    %190 = vmatpush1.xpose.msra.mxu0 %v176
    %191 = vmatprep.subr.mxu0 0.0
    %192 = vmatpush1.xpose.msra.mxu0 %v177
    %193 = vmatprep.subr.mxu0 0.0
    %194 = vmatpush1.xpose.msra.mxu0 %v178
    %195 = vmatprep.subr.mxu0 0.0
    %196 = vmatpush1.xpose.msra.mxu0 %v179
    %197 = vmatprep.subr.mxu0 0.0
    %198 = vmatpush1.xpose.msra.mxu0 %v180
    %199 = vmatprep.subr.mxu0 0.0
    %200 = vmatpush1.xpose.msra.mxu0 %v181
    %201 = vmatprep.subr.mxu0 0.0
    %202 = vmatpush1.xpose.msra.mxu0 0.0
    %203 = vmatprep.subr.mxu0 0.0
    %204 = vmatpush1.xpose.msra.mxu0 0.0
    %205 = vmatprep.subr.mxu0 0.0
    %206 = vmatpush1.xpose.msra.mxu0 0.0
    %207 = vmatprep.subr.mxu0 0.0
    %208 = vmatpush1.xpose.msra.mxu0 0.0
    %209 = vmatprep.subr.mxu0 0.0
    %210 = vmatpush1.xpose.msra.mxu0 0.0
    %211 = vmatprep.subr.mxu0 0.0
    %212 = vmatpush1.xpose.msra.mxu0 0.0
    %213 = vmatprep.subr.mxu0 0.0
    %214 = vmatpush1.xpose.msra.mxu0 0.0
    %215 = vmatprep.subr.mxu0 0.0
    %216 = vmatpush1.xpose.msra.mxu0 0.0
    %217 = vmatprep.subr.mxu0 0.0
    %218 = vmatpush1.xpose.msra.mxu0 0.0
    %219 = vmatprep.subr.mxu0 0.0
    %220 = vmatpush1.xpose.msra.mxu0 0.0
    %221 = vmatprep.subr.mxu0 0.0
    %222 = vmatpush1.xpose.msra.mxu0 0.0
    %223 = vmatprep.subr.mxu0 0.0
    %224 = vmatpush1.xpose.msra.mxu0 0.0
    %225 = vmatprep.subr.mxu0 0.0
    %226 = vmatpush1.xpose.msra.mxu0 0.0
    %227 = vmatprep.subr.mxu0 0.0
    %228 = vmatpush1.xpose.msra.mxu0 0.0
    %229 = vmatprep.subr.mxu0 0.0
    %230 = vmatpush1.xpose.msra.mxu0 0.0
    %231 = vmatprep.subr.mxu0 0.0
    %232 = vmatpush1.xpose.msra.mxu0 0.0
    %233 = vmatprep.subr.mxu0 0.0
    %234 = vmatpush1.xpose.msra.mxu0 0.0
    %235 = vmatprep.subr.mxu0 0.0
    %236 = vmatpush1.xpose.msra.mxu0 0.0
    %237 = vmatprep.subr.mxu0 0.0
    %238 = vmatpush1.xpose.msra.mxu0 0.0
    %239 = vmatprep.subr.mxu0 0.0
    %240 = vmatpush1.xpose.msra.mxu0 0.0
    %241 = vmatprep.subr.mxu0 0.0
    %242 = vmatpush1.xpose.msra.mxu0 0.0
    %243 = vmatprep.subr.mxu0 0.0
    %244 = vmatpush1.xpose.msra.mxu0 0.0
    %245 = vmatprep.subr.mxu0 0.0
    %246 = vmatpush1.xpose.msra.mxu0 0.0
    %247 = vmatprep.subr.mxu0 0.0
    %248 = vmatpush1.xpose.msra.mxu0 0.0
    %249 = vmatprep.mubr.f32.mxu0 0.0
    %250 = vmatmul.mubr.f32.gmra.mrb[0].mxu0 %v182
    %v251 = vpop.f32.mrb[0].mxu0
    %v252 = vadd.f32 %v184, %v251
    %v253 = vpop.f32.mrb[0].mxu0
    %254 = vdwg.mxu0
    %vm255 = vcmask 516096
    %256 = vst.msk [vmem:[#allocation3] sm:$0x1] %vm255, %v252
    // Predicated region
    $region22: #{simple_model_forward.1} parent=1 // pred_check
      _
    $region23: #{simple_model_forward.1} parent=1 // pred_check_branch
      %258 = sbr.rel (0) target = $region25
    $region24: #{simple_model_forward.1} parent=1 // pred_region
      %s260 = ssub.s32 16, 16
      %261 = vsyncadd [#allocation4], %s260
      %s263 = sshll.u32 [#allocation3], 4
      %s264 = int_to_ptr.vmem [resolvable:$true] %s263
      %266 = dma.vmem_to_hbm [thread:$0]  %s264, 16, %s5, [#allocation4]
    $region25: #{simple_model_forward.1} parent=1 // pred_fallthru
      _
    // Predicated region
    $region26: #{simple_model_forward.1} parent=1 // pred_check
      _
    $region27: #{simple_model_forward.1} parent=1 // pred_check_branch
      %268 = sbr.rel (0) target = $region29
    $region28: #{simple_model_forward.1} parent=1 // pred_region
      %269 = dma.done [#allocation4], 16
    $region29: #{simple_model_forward.1} parent=1 // pred_fallthru
      _
    %270 = vsyncpa [#allocation4], 1

</llo_original>
